<compile_context>
chip_gen: v6e
topology: v6e:2x2x1
jax: 0.10.0
libtpu: 0.0.40
codegen_flags: <defaults>
</compile_context>

<pallas_src>
import functools

import jax
import jax.numpy as jnp
from jax.experimental import pallas as pl
from jax.experimental.pallas import tpu as pltpu

# TODO(synk): the pretrained BERT encoder itself is not translated; the kernel
# takes its last_hidden_state as input.

HIDDEN = 768        # BERT hidden size (Conv1d in_channels)
CONV_C = 128        # Conv1d out_channels
KSIZE = 3           # Conv1d kernel_size (padding=1 -> "same" output length)


def _conv_pool_kernel(bt, seq_len, x_ref, wcat_ref, bconv_ref, out_ref):
    """conv1d(k=3, pad=1) -> ReLU -> max over seq, for Bt elements at once.

    x_ref:     (Bt, seq_len, HIDDEN)        bf16 hidden states (unpadded)
    wcat_ref:  (HIDDEN, KSIZE*CONV_C)       bf16, lane groups [W_0 | W_1 | W_2]
    bconv_ref: (1, CONV_C)                  f32
    out_ref:   (Bt, CONV_C)                 f32 pooled features (lane-dense)
    """
    rows = bt * seq_len

    # One large MXU matmul for all Bt elements and all 3 taps.
    x = x_ref[...].reshape(rows, HIDDEN)                                # bf16
    y = jnp.dot(x, wcat_ref[...], preferred_element_type=jnp.float32)  # (rows, 3C) f32

    # Lane-aligned (multiple-of-128) slices — no re-tiling copies.
    y0 = y[:, 0 * CONV_C:1 * CONV_C]   # tap k=0 : contributes x[l-1] @ W0 to row l
    y1 = y[:, 1 * CONV_C:2 * CONV_C]   # tap k=1 : x[l]   @ W1
    y2 = y[:, 2 * CONV_C:3 * CONV_C]   # tap k=2 : x[l+1] @ W2

    # Sequence position of every flattened row; mask the zero-pad boundaries
    # (also kills any cross-batch-element leakage from the roll wraparound).
    l_idx = jax.lax.broadcasted_iota(jnp.int32, (rows, CONV_C), 0) % seq_len
    y0s = jnp.where(l_idx == 0, 0.0, pltpu.roll(y0, shift=1, axis=0))
    y2s = jnp.where(l_idx == seq_len - 1, 0.0,
                    pltpu.roll(y2, shift=rows - 1, axis=0))

    conv = jnp.maximum(y0s + y1 + y2s + bconv_ref[...], 0.0)           # ReLU, f32
    pooled = jnp.max(conv.reshape(bt, seq_len, CONV_C), axis=1)        # (Bt, C)
    out_ref[...] = pooled.astype(out_ref.dtype)


def _choose_block_batch(B, L, target_rows=256, max_rows=4096):
    """Pick Bt | B so Bt*L feeds the MXU well while staying VMEM-friendly."""
    divisors = [d for d in range(1, B + 1) if B % d == 0 and d * L <= max_rows]
    for d in divisors:                       # smallest divisor reaching target
        if d * L >= target_rows:             # (keeps >1 grid step when possible
            return d                         #  for megacore / v7x dual-TC)
    return divisors[-1]                      # otherwise: as big as fits


def hybrid_classifier_head(hidden_states, conv_w, conv_b, fc_w, fc_b):
    """hidden_states: [B, L, 768] (= bert last_hidden_state)
       conv_w: [CONV_C, HIDDEN, KSIZE]  (PyTorch Conv1d weight layout)
       conv_b: [CONV_C]
       fc_w:   [num_classes, CONV_C]    (PyTorch Linear weight layout)
       fc_b:   [num_classes]
       returns: [B, num_classes] float32 logits
    """
    B, L, H = hidden_states.shape
    assert H == HIDDEN
    num_classes = fc_w.shape[0]

    bt = _choose_block_batch(B, L)
    grid = (B // bt,)

    # bf16 inputs -> native MXU path; accumulation stays f32 inside the kernel.
    x = hidden_states.astype(jnp.bfloat16)
    # (C, H, K) -> (H, K, C) -> (H, K*C): lane groups [W_0 | W_1 | W_2],
    # with W_k[h, c] = conv_w[c, h, k].
    wcat = jnp.transpose(conv_w, (1, 2, 0)).reshape(
        HIDDEN, KSIZE * CONV_C).astype(jnp.bfloat16)
    bconv = conv_b.reshape(1, CONV_C).astype(jnp.float32)

    kernel = functools.partial(_conv_pool_kernel, bt, L)

    flops = 2 * B * L * HIDDEN * (KSIZE * CONV_C)
    bytes_accessed = (B * L * HIDDEN * 2            # bf16 activations
                      + HIDDEN * KSIZE * CONV_C * 2  # bf16 conv weight
                      + CONV_C * 4                   # f32 bias
                      + B * CONV_C * 4)              # f32 pooled output

    pooled = pl.pallas_call(
        kernel,
        out_shape=jax.ShapeDtypeStruct((B, CONV_C), jnp.float32),
        grid_spec=pltpu.PrefetchScalarGridSpec(
            num_scalar_prefetch=0,
            grid=grid,
            in_specs=[
                pl.BlockSpec((bt, L, HIDDEN), lambda i: (i, 0, 0)),
                pl.BlockSpec((HIDDEN, KSIZE * CONV_C), lambda i: (0, 0)),
                pl.BlockSpec((1, CONV_C), lambda i: (0, 0)),
            ],
            out_specs=pl.BlockSpec((bt, CONV_C), lambda i: (i, 0)),
        ),
        compiler_params=pltpu.CompilerParams(
            dimension_semantics=("parallel",)),
        cost_estimate=pl.CostEstimate(
            flops=flops, transcendentals=0, bytes_accessed=bytes_accessed),
    )(x, wcat, bconv)

    # Tiny FC head (num_classes << 128 lanes) stays in plain XLA so the kernel
    # output store is a full-lane, unmasked vst.
    return pooled @ fc_w.T.astype(jnp.float32) + fc_b[None, :].astype(jnp.float32)


def _reference(hidden_states, conv_w, conv_b, fc_w, fc_b):
    """Pure-JAX f32 reference mirroring the PyTorch forward (post-BERT)."""
    B, L, H = hidden_states.shape
    xp = jnp.pad(hidden_states, ((0, 0), (1, 1), (0, 0)))            # [B, L+2, H]
    conv = sum(jnp.einsum('blh,ch->blc', xp[:, k:k + L], conv_w[:, :, k])
               for k in range(KSIZE)) + conv_b[None, None, :]        # [B, L, C]
    conv = jnp.maximum(conv, 0.0)
    pooled = jnp.max(conv, axis=1)                                   # [B, C]
    return pooled @ fc_w.T + fc_b[None, :]


if __name__ == "__main__":
    B, L, NUM_CLASSES = 2, 8, 4

    key = jax.random.PRNGKey(0)
    k_x, k_cw, k_cb, k_fw, k_fb = jax.random.split(key, 5)

    # Simulated BERT last_hidden_state and deterministic synthetic parameters.
    hidden_states = jax.random.normal(k_x, (B, L, HIDDEN), jnp.float32)
    conv_w = 0.02 * jax.random.normal(k_cw, (CONV_C, HIDDEN, KSIZE), jnp.float32)
    conv_b = 0.01 * jax.random.normal(k_cb, (CONV_C,), jnp.float32)
    fc_w = 0.05 * jax.random.normal(k_fw, (NUM_CLASSES, CONV_C), jnp.float32)
    fc_b = 0.01 * jax.random.normal(k_fb, (NUM_CLASSES,), jnp.float32)

    out = hybrid_classifier_head(hidden_states, conv_w, conv_b, fc_w, fc_b)
    out = jax.block_until_ready(out)

    ref = _reference(hidden_states, conv_w, conv_b, fc_w, fc_b)
    assert out.shape == (B, NUM_CLASSES)
    # bf16 activations/weights with f32 accumulation -> ~1e-2-level deviation.
    assert jnp.allclose(out, ref, atol=5e-2, rtol=5e-2), (out, ref)

    print("KERNEL_OK")
</pallas_src>

<mosaic_0001>
module attributes {stable_mosaic.version = 11 : i64} {
  func.func @_conv_pool_kernel(%arg0: i32, %arg1: memref<2x8x768xbf16, #tpu.memory_space<vmem>>, %arg2: memref<768x384xbf16, #tpu.memory_space<vmem>>, %arg3: memref<1x128xf32, #tpu.memory_space<vmem>>, %arg4: memref<2x128xf32, #tpu.memory_space<vmem>>) attributes {dimension_semantics = [#tpu.dimension_semantics<parallel>], iteration_bounds = array<i64: 1>, scalar_prefetch = 0 : i64, scratch_operands = 0 : i64, tpu.core_type = #tpu.core_type<tc>, window_params = [{transform_indices = @transform_0, window_bounds = array<i64: 2, 8, 768>}, {pipeline_mode = #tpu.pipeline_mode<synchronous>, transform_indices = @transform_1, window_bounds = array<i64: 768, 384>}, {pipeline_mode = #tpu.pipeline_mode<synchronous>, transform_indices = @transform_2, window_bounds = array<i64: 1, 128>}, {transform_indices = @transform_3, window_bounds = array<i64: 2, 128>}]} {
    %c0 = arith.constant 0 : index
    %c0_0 = arith.constant 0 : index
    %c0_1 = arith.constant 0 : index
    %0 = vector.load %arg1[%c0, %c0_0, %c0_1] : memref<2x8x768xbf16, #tpu.memory_space<vmem>>, vector<2x8x768xbf16>
    %1 = vector.shape_cast %0 : vector<2x8x768xbf16> to vector<16x768xbf16>
    %c0_2 = arith.constant 0 : index
    %c0_3 = arith.constant 0 : index
    %2 = vector.load %arg2[%c0_2, %c0_3] : memref<768x384xbf16, #tpu.memory_space<vmem>>, vector<768x384xbf16>
    %cst = arith.constant dense<0.000000e+00> : vector<16x384xf32>
    %3 = tpu.matmul %1, %2, %cst {dimension_numbers = #tpu.dot_dimension_numbers<[1], [0], [0], [1], [0, 0, 1, 1], [], []>} : vector<16x768xbf16>, vector<768x384xbf16>, vector<16x384xf32> -> vector<16x384xf32>
    %4 = vector.extract_strided_slice %3 {offsets = [0, 0], sizes = [16, 128], strides = [1, 1]} : vector<16x384xf32> to vector<16x128xf32>
    %5 = vector.extract_strided_slice %3 {offsets = [0, 128], sizes = [16, 128], strides = [1, 1]} : vector<16x384xf32> to vector<16x128xf32>
    %6 = vector.extract_strided_slice %3 {offsets = [0, 256], sizes = [16, 128], strides = [1, 1]} : vector<16x384xf32> to vector<16x128xf32>
    %7 = tpu.iota {dimensions = array<i32: 0>} : vector<16x128xi32>
    %c8_i32 = arith.constant 8 : i32
    %c0_i32 = arith.constant 0 : i32
    %8 = arith.cmpi eq, %c8_i32, %c0_i32 : i32
    %c1_i32 = arith.constant 1 : i32
    %9 = arith.select %8, %c1_i32, %c8_i32 : i32
    %10 = vector.broadcast %9 : i32 to vector<16x128xi32>
    %11 = arith.remsi %7, %10 : vector<16x128xi32>
    %c0_i32_4 = arith.constant 0 : i32
    %12 = vector.broadcast %c0_i32_4 : i32 to vector<16x128xi32>
    %13 = arith.cmpi ne, %11, %12 : vector<16x128xi32>
    %c0_i32_5 = arith.constant 0 : i32
    %14 = vector.broadcast %c0_i32_5 : i32 to vector<16x128xi32>
    %15 = arith.cmpi slt, %11, %14 : vector<16x128xi32>
    %c0_i32_6 = arith.constant 0 : i32
    %16 = arith.cmpi slt, %9, %c0_i32_6 : i32
    %17 = vector.broadcast %16 : i1 to vector<16x128xi1>
    %18 = vector.broadcast %17 : vector<16x128xi1> to vector<16x128xi1>
    %19 = arith.xori %15, %18 : vector<16x128xi1>
    %20 = arith.andi %19, %13 : vector<16x128xi1>
    %21 = vector.broadcast %9 : i32 to vector<16x128xi32>
    %22 = arith.addi %11, %21 : vector<16x128xi32>
    %23 = arith.select %20, %22, %11 : vector<16x128xi1>, vector<16x128xi32>
    %c0_i32_7 = arith.constant 0 : i32
    %24 = vector.broadcast %c0_i32_7 : i32 to vector<16x128xi32>
    %25 = arith.cmpi eq, %23, %24 : vector<16x128xi32>
    %c1_i32_8 = arith.constant 1 : i32
    %26 = tpu.dynamic_rotate %4 by %c1_i32_8 dim 0 : vector<16x128xf32>, i32 -> vector<16x128xf32>
    %cst_9 = arith.constant 0.000000e+00 : f32
    %27 = vector.broadcast %cst_9 : f32 to vector<16x128xf32>
    %28 = arith.select %25, %27, %26 : vector<16x128xi1>, vector<16x128xf32>
    %c7_i32 = arith.constant 7 : i32
    %29 = vector.broadcast %c7_i32 : i32 to vector<16x128xi32>
    %30 = arith.cmpi eq, %23, %29 : vector<16x128xi32>
    %c15_i32 = arith.constant 15 : i32
    %31 = tpu.dynamic_rotate %6 by %c15_i32 dim 0 : vector<16x128xf32>, i32 -> vector<16x128xf32>
    %cst_10 = arith.constant 0.000000e+00 : f32
    %32 = vector.broadcast %cst_10 : f32 to vector<16x128xf32>
    %33 = arith.select %30, %32, %31 : vector<16x128xi1>, vector<16x128xf32>
    %34 = arith.addf %28, %5 : vector<16x128xf32>
    %35 = arith.addf %34, %33 : vector<16x128xf32>
    %c0_11 = arith.constant 0 : index
    %c0_12 = arith.constant 0 : index
    %36 = vector.load %arg3[%c0_11, %c0_12] : memref<1x128xf32, #tpu.memory_space<vmem>>, vector<1x128xf32>
    %37 = vector.broadcast %36 : vector<1x128xf32> to vector<16x128xf32>
    %38 = arith.addf %35, %37 : vector<16x128xf32>
    %cst_13 = arith.constant 0.000000e+00 : f32
    %39 = vector.broadcast %cst_13 : f32 to vector<16x128xf32>
    %40 = arith.maximumf %38, %39 : vector<16x128xf32>
    %41 = vector.shape_cast %40 : vector<16x128xf32> to vector<2x8x128xf32>
    %cst_14 = arith.constant dense<0xFF800000> : vector<2x128xf32>
    %42 = vector.multi_reduction <maximumf>, %41, %cst_14 [1] : vector<2x8x128xf32> to vector<2x128xf32>
    %c0_15 = arith.constant 0 : index
    %c0_16 = arith.constant 0 : index
    %43 = vector.load %arg4[%c0_15, %c0_16] : memref<2x128xf32, #tpu.memory_space<vmem>>, vector<2x128xf32>
    tpu.vector_store %arg4[%c0_15, %c0_16], %42 {strides = array<i32>} : memref<2x128xf32, #tpu.memory_space<vmem>>, vector<2x128xf32>,
    return
  }
  func.func @transform_0(%arg0: i32) -> (i32, i32, i32) {
    %c0_i32 = arith.constant 0 : i32
    %c0_i32_0 = arith.constant 0 : i32
    %c0_i32_1 = arith.constant 0 : i32
    return %arg0, %c0_i32, %c0_i32_0 : i32, i32, i32
  }
  func.func @transform_1(%arg0: i32) -> (i32, i32) {
    %c0_i32 = arith.constant 0 : i32
    %c0_i32_0 = arith.constant 0 : i32
    %c0_i32_1 = arith.constant 0 : i32
    return %c0_i32, %c0_i32_0 : i32, i32
  }
  func.func @transform_2(%arg0: i32) -> (i32, i32) {
    %c0_i32 = arith.constant 0 : i32
    %c0_i32_0 = arith.constant 0 : i32
    %c0_i32_1 = arith.constant 0 : i32
    return %c0_i32, %c0_i32_0 : i32, i32
  }
  func.func @transform_3(%arg0: i32) -> (i32, i32) {
    %c0_i32 = arith.constant 0 : i32
    %c0_i32_0 = arith.constant 0 : i32
    return %arg0, %c0_i32 : i32, i32
  }
}

</mosaic_0001>

<llo_original>
// kernel: tpu_custom_call.1
$region0: #{tpu_custom_call.1}
  #allocation0 [shape = 'u32[]', space=smem, size = 0x4, offset = 0x4, fixed_abs, tag = 'smem constant byte address 0x4 - core index']
  #allocation1 [shape = 'u32[144,128]{1,0:T(1,128)}', space=vmem, size = 0x12000, scoped, tag = 'internal scratch']
  %s0 = inlined_call_operand.hbm [shape: bf16[2,8,768], index: 0, kind: input, shape index: {}]
  %s1 = inlined_call_operand.hbm [shape: bf16[768,384], index: 1, kind: input, shape index: {}]
  %s2 = inlined_call_operand.vmem [shape: f32[1,128], index: 2, kind: input, shape index: {}]
  %s3 = inlined_call_operand.hbm [shape: f32[2,128], index: 3, kind: output, shape index: {}]
  %s4 = sld [smem:[#allocation0]]
  $region30: #{tpu_custom_call.1} parent=0
    _
  %s6 = ssub.s32 1, %s4
  %s7 = scalar_select 0, %s6, %s4
  $region1: #{tpu_custom_call.1} parent=0
    #allocation2 [shape = 'u8[24576]{0}', space=vmem, size = 0x6000, scoped, tag = 'input window, operand 0, single buffered']
    #allocation3 [shape = 's32[1]{0}', space=sflag, size = 0x4, scoped, tag = 'scoped memory for tpu_custom_call.1']
    #allocation4 [shape = 's32[1]{0}', space=sflag, size = 0x4, scoped, tag = 'scoped memory for tpu_custom_call.1']
    #allocation5 [shape = 'u8[589824]{0}', space=vmem, size = 0x90000, scoped, tag = 'input window, operand 1, single buffered']
    #allocation6 [shape = 's32[1]{0}', space=sflag, size = 0x4, scoped, tag = 'scoped memory for tpu_custom_call.1']
    #allocation7 [shape = 'u8[1024]{0}', space=vmem, size = 0x400, scoped, tag = 'output window, operand 0, single buffered']
    %8 = vsyncpa [#allocation3], 0
    %9 = vsyncpa [#allocation6], 0
    %10 = vsyncpa [#allocation4], 0
    // Predicated region
    $region2: #{tpu_custom_call.1} parent=1 // pred_check
      _
    $region3: #{tpu_custom_call.1} parent=1 // pred_check_branch
      %12 = sbr.rel (0) target = $region5
    $region4: #{tpu_custom_call.1} parent=1 // pred_region
      %s14 = ssub.s32 768, 768
      %15 = vsyncadd [#allocation3], %s14
      %s16 = sshll.u32 [#allocation2], 4
      %s17 = int_to_ptr.vmem [resolvable:$true] %s16
      %22 = dma.hbm_to_vmem [thread:$0]  %s0, 768, %s17, [#allocation3], 384, 384, 24
    $region5: #{tpu_custom_call.1} parent=1 // pred_fallthru
      _
    // Predicated region
    $region6: #{tpu_custom_call.1} parent=1 // pred_check
      _
    $region7: #{tpu_custom_call.1} parent=1 // pred_check_branch
      %24 = sbr.rel (0) target = $region9
    $region8: #{tpu_custom_call.1} parent=1 // pred_region
      %s26 = ssub.s32 18432, 18432
      %27 = vsyncadd [#allocation6], %s26
      %s28 = sshll.u32 [#allocation5], 4
      %s29 = int_to_ptr.vmem [resolvable:$true] %s28
      %34 = dma.hbm_to_vmem [thread:$0]  %s1, 18432, %s29, [#allocation6], 192, 192, 12
    $region9: #{tpu_custom_call.1} parent=1 // pred_fallthru
      _
    // Predicated region
    $region10: #{tpu_custom_call.1} parent=1 // pred_check
      _
    $region11: #{tpu_custom_call.1} parent=1 // pred_check_branch
      %36 = sbr.rel (0) target = $region13
    $region12: #{tpu_custom_call.1} parent=1 // pred_region
      _
    $region13: #{tpu_custom_call.1} parent=1 // pred_fallthru
      _
    // Predicated region
    $region14: #{tpu_custom_call.1} parent=1 // pred_check
      _
    $region15: #{tpu_custom_call.1} parent=1 // pred_check_branch
      %38 = sbr.rel (0) target = $region17
    $region16: #{tpu_custom_call.1} parent=1 // pred_region
      %39 = dma.done [#allocation3], 768
    $region17: #{tpu_custom_call.1} parent=1 // pred_fallthru
      _
    // Predicated region
    $region18: #{tpu_custom_call.1} parent=1 // pred_check
      _
    $region19: #{tpu_custom_call.1} parent=1 // pred_check_branch
      %41 = sbr.rel (0) target = $region21
    $region20: #{tpu_custom_call.1} parent=1 // pred_region
      %42 = dma.done [#allocation6], 18432
    $region21: #{tpu_custom_call.1} parent=1 // pred_fallthru
      _
    %v44 = vld [vmem:[#allocation2] sm:$0xff]
    %v45 = vld [vmem:[#allocation2 + $0x8] sm:$0xff]
    %v46 = vld [vmem:[#allocation2 + $0x10] sm:$0xff]
    %v47 = vld [vmem:[#allocation2 + $0x18] sm:$0xff]
    %v48 = vld [vmem:[#allocation2 + $0x20] sm:$0xff]
    %v49 = vld [vmem:[#allocation2 + $0x28] sm:$0xff]
    %v50 = vld [vmem:[#allocation5] sm:$0xff]
    %v51 = vld [vmem:[#allocation5 + $0x8] sm:$0xf]
    %v52 = vld [vmem:[#allocation5 + $0xc] sm:$0xff]
    %v53 = vld [vmem:[#allocation5 + $0x14] sm:$0xf]
    %v54 = vld [vmem:[#allocation5 + $0x18] sm:$0xff]
    %v55 = vld [vmem:[#allocation5 + $0x20] sm:$0xf]
    %v56 = vld [vmem:[#allocation5 + $0x24] sm:$0xff]
    %v57 = vld [vmem:[#allocation5 + $0x2c] sm:$0xf]
    %v58 = vld [vmem:[#allocation5 + $0x30] sm:$0xff]
    %v59 = vld [vmem:[#allocation5 + $0x38] sm:$0xf]
    %v60 = vld [vmem:[#allocation5 + $0x3c] sm:$0xff]
    %v61 = vld [vmem:[#allocation5 + $0x44] sm:$0xf]
    %v62 = vld [vmem:[#allocation5 + $0x48] sm:$0xff]
    %v63 = vld [vmem:[#allocation5 + $0x50] sm:$0xf]
    %v64 = vld [vmem:[#allocation5 + $0x54] sm:$0xff]
    %v65 = vld [vmem:[#allocation5 + $0x5c] sm:$0xf]
    %v66 = vld [vmem:[#allocation5 + $0x60] sm:$0xff]
    %v67 = vld [vmem:[#allocation5 + $0x68] sm:$0xf]
    %v68 = vld [vmem:[#allocation5 + $0x6c] sm:$0xff]
    %v69 = vld [vmem:[#allocation5 + $0x74] sm:$0xf]
    %v70 = vld [vmem:[#allocation5 + $0x78] sm:$0xff]
    %v71 = vld [vmem:[#allocation5 + $0x80] sm:$0xf]
    %v72 = vld [vmem:[#allocation5 + $0x84] sm:$0xff]
    %v73 = vld [vmem:[#allocation5 + $0x8c] sm:$0xf]
    %v74 = vld [vmem:[#allocation5 + $0x90] sm:$0xff]
    %v75 = vld [vmem:[#allocation5 + $0x98] sm:$0xf]
    %v76 = vld [vmem:[#allocation5 + $0x9c] sm:$0xff]
    %v77 = vld [vmem:[#allocation5 + $0xa4] sm:$0xf]
    %v78 = vld [vmem:[#allocation5 + $0xa8] sm:$0xff]
    %v79 = vld [vmem:[#allocation5 + $0xb0] sm:$0xf]
    %v80 = vld [vmem:[#allocation5 + $0xb4] sm:$0xff]
    %v81 = vld [vmem:[#allocation5 + $0xbc] sm:$0xf]
    %v82 = vld [vmem:[#allocation5 + $0xc0] sm:$0xff]
    %v83 = vld [vmem:[#allocation5 + $0xc8] sm:$0xf]
    %v84 = vld [vmem:[#allocation5 + $0xcc] sm:$0xff]
    %v85 = vld [vmem:[#allocation5 + $0xd4] sm:$0xf]
    %v86 = vld [vmem:[#allocation5 + $0xd8] sm:$0xff]
    %v87 = vld [vmem:[#allocation5 + $0xe0] sm:$0xf]
    %v88 = vld [vmem:[#allocation5 + $0xe4] sm:$0xff]
    %v89 = vld [vmem:[#allocation5 + $0xec] sm:$0xf]
    %v90 = vld [vmem:[#allocation5 + $0xf0] sm:$0xff]
    %v91 = vld [vmem:[#allocation5 + $0xf8] sm:$0xf]
    %v92 = vld [vmem:[#allocation5 + $0xfc] sm:$0xff]
    %v93 = vld [vmem:[#allocation5 + $0x104] sm:$0xf]
    %v94 = vld [vmem:[#allocation5 + $0x108] sm:$0xff]
    %v95 = vld [vmem:[#allocation5 + $0x110] sm:$0xf]
    %v96 = vld [vmem:[#allocation5 + $0x114] sm:$0xff]
    %v97 = vld [vmem:[#allocation5 + $0x11c] sm:$0xf]
    %v98 = vld [vmem:[#allocation5 + $0x120] sm:$0xff]
    %v99 = vld [vmem:[#allocation5 + $0x128] sm:$0xf]
    %v100 = vld [vmem:[#allocation5 + $0x12c] sm:$0xff]
    %v101 = vld [vmem:[#allocation5 + $0x134] sm:$0xf]
    %v102 = vld [vmem:[#allocation5 + $0x138] sm:$0xff]
    %v103 = vld [vmem:[#allocation5 + $0x140] sm:$0xf]
    %v104 = vld [vmem:[#allocation5 + $0x144] sm:$0xff]
    %v105 = vld [vmem:[#allocation5 + $0x14c] sm:$0xf]
    %v106 = vld [vmem:[#allocation5 + $0x150] sm:$0xff]
    %v107 = vld [vmem:[#allocation5 + $0x158] sm:$0xf]
    %v108 = vld [vmem:[#allocation5 + $0x15c] sm:$0xff]
    %v109 = vld [vmem:[#allocation5 + $0x164] sm:$0xf]
    %v110 = vld [vmem:[#allocation5 + $0x168] sm:$0xff]
    %v111 = vld [vmem:[#allocation5 + $0x170] sm:$0xf]
    %v112 = vld [vmem:[#allocation5 + $0x174] sm:$0xff]
    %v113 = vld [vmem:[#allocation5 + $0x17c] sm:$0xf]
    %v114 = vld [vmem:[#allocation5 + $0x180] sm:$0xff]
    %v115 = vld [vmem:[#allocation5 + $0x188] sm:$0xf]
    %v116 = vld [vmem:[#allocation5 + $0x18c] sm:$0xff]
    %v117 = vld [vmem:[#allocation5 + $0x194] sm:$0xf]
    %v118 = vld [vmem:[#allocation5 + $0x198] sm:$0xff]
    %v119 = vld [vmem:[#allocation5 + $0x1a0] sm:$0xf]
    %v120 = vld [vmem:[#allocation5 + $0x1a4] sm:$0xff]
    %v121 = vld [vmem:[#allocation5 + $0x1ac] sm:$0xf]
    %v122 = vld [vmem:[#allocation5 + $0x1b0] sm:$0xff]
    %v123 = vld [vmem:[#allocation5 + $0x1b8] sm:$0xf]
    %v124 = vld [vmem:[#allocation5 + $0x1bc] sm:$0xff]
    %v125 = vld [vmem:[#allocation5 + $0x1c4] sm:$0xf]
    %v126 = vld [vmem:[#allocation5 + $0x1c8] sm:$0xff]
    %v127 = vld [vmem:[#allocation5 + $0x1d0] sm:$0xf]
    %v128 = vld [vmem:[#allocation5 + $0x1d4] sm:$0xff]
    %v129 = vld [vmem:[#allocation5 + $0x1dc] sm:$0xf]
    %v130 = vld [vmem:[#allocation5 + $0x1e0] sm:$0xff]
    %v131 = vld [vmem:[#allocation5 + $0x1e8] sm:$0xf]
    %v132 = vld [vmem:[#allocation5 + $0x1ec] sm:$0xff]
    %v133 = vld [vmem:[#allocation5 + $0x1f4] sm:$0xf]
    %v134 = vld [vmem:[#allocation5 + $0x1f8] sm:$0xff]
    %v135 = vld [vmem:[#allocation5 + $0x200] sm:$0xf]
    %v136 = vld [vmem:[#allocation5 + $0x204] sm:$0xff]
    %v137 = vld [vmem:[#allocation5 + $0x20c] sm:$0xf]
    %v138 = vld [vmem:[#allocation5 + $0x210] sm:$0xff]
    %v139 = vld [vmem:[#allocation5 + $0x218] sm:$0xf]
    %v140 = vld [vmem:[#allocation5 + $0x21c] sm:$0xff]
    %v141 = vld [vmem:[#allocation5 + $0x224] sm:$0xf]
    %v142 = vld [vmem:[#allocation5 + $0x228] sm:$0xff]
    %v143 = vld [vmem:[#allocation5 + $0x230] sm:$0xf]
    %v144 = vld [vmem:[#allocation5 + $0x234] sm:$0xff]
    %v145 = vld [vmem:[#allocation5 + $0x23c] sm:$0xf]
    %v146 = vld [vmem:[#allocation5 + $0x240] sm:$0xff]
    %v147 = vld [vmem:[#allocation5 + $0x248] sm:$0xf]
    %v148 = vld [vmem:[#allocation5 + $0x24c] sm:$0xff]
    %v149 = vld [vmem:[#allocation5 + $0x254] sm:$0xf]
    %v150 = vld [vmem:[#allocation5 + $0x258] sm:$0xff]
    %v151 = vld [vmem:[#allocation5 + $0x260] sm:$0xf]
    %v152 = vld [vmem:[#allocation5 + $0x264] sm:$0xff]
    %v153 = vld [vmem:[#allocation5 + $0x26c] sm:$0xf]
    %v154 = vld [vmem:[#allocation5 + $0x270] sm:$0xff]
    %v155 = vld [vmem:[#allocation5 + $0x278] sm:$0xf]
    %v156 = vld [vmem:[#allocation5 + $0x27c] sm:$0xff]
    %v157 = vld [vmem:[#allocation5 + $0x284] sm:$0xf]
    %v158 = vld [vmem:[#allocation5 + $0x288] sm:$0xff]
    %v159 = vld [vmem:[#allocation5 + $0x290] sm:$0xf]
    %v160 = vld [vmem:[#allocation5 + $0x294] sm:$0xff]
    %v161 = vld [vmem:[#allocation5 + $0x29c] sm:$0xf]
    %v162 = vld [vmem:[#allocation5 + $0x2a0] sm:$0xff]
    %v163 = vld [vmem:[#allocation5 + $0x2a8] sm:$0xf]
    %v164 = vld [vmem:[#allocation5 + $0x2ac] sm:$0xff]
    %v165 = vld [vmem:[#allocation5 + $0x2b4] sm:$0xf]
    %v166 = vld [vmem:[#allocation5 + $0x2b8] sm:$0xff]
    %v167 = vld [vmem:[#allocation5 + $0x2c0] sm:$0xf]
    %v168 = vld [vmem:[#allocation5 + $0x2c4] sm:$0xff]
    %v169 = vld [vmem:[#allocation5 + $0x2cc] sm:$0xf]
    %v170 = vld [vmem:[#allocation5 + $0x2d0] sm:$0xff]
    %v171 = vld [vmem:[#allocation5 + $0x2d8] sm:$0xf]
    %v172 = vld [vmem:[#allocation5 + $0x2dc] sm:$0xff]
    %v173 = vld [vmem:[#allocation5 + $0x2e4] sm:$0xf]
    %v174 = vld [vmem:[#allocation5 + $0x2e8] sm:$0xff]
    %v175 = vld [vmem:[#allocation5 + $0x2f0] sm:$0xf]
    %v176 = vld [vmem:[#allocation5 + $0x2f4] sm:$0xff]
    %v177 = vld [vmem:[#allocation5 + $0x2fc] sm:$0xf]
    %v178 = vld [vmem:[#allocation5 + $0x300] sm:$0xff]
    %v179 = vld [vmem:[#allocation5 + $0x308] sm:$0xf]
    %v180 = vld [vmem:[#allocation5 + $0x30c] sm:$0xff]
    %v181 = vld [vmem:[#allocation5 + $0x314] sm:$0xf]
    %v182 = vld [vmem:[#allocation5 + $0x318] sm:$0xff]
    %v183 = vld [vmem:[#allocation5 + $0x320] sm:$0xf]
    %v184 = vld [vmem:[#allocation5 + $0x324] sm:$0xff]
    %v185 = vld [vmem:[#allocation5 + $0x32c] sm:$0xf]
    %v186 = vld [vmem:[#allocation5 + $0x330] sm:$0xff]
    %v187 = vld [vmem:[#allocation5 + $0x338] sm:$0xf]
    %v188 = vld [vmem:[#allocation5 + $0x33c] sm:$0xff]
    %v189 = vld [vmem:[#allocation5 + $0x344] sm:$0xf]
    %v190 = vld [vmem:[#allocation5 + $0x348] sm:$0xff]
    %v191 = vld [vmem:[#allocation5 + $0x350] sm:$0xf]
    %v192 = vld [vmem:[#allocation5 + $0x354] sm:$0xff]
    %v193 = vld [vmem:[#allocation5 + $0x35c] sm:$0xf]
    %v194 = vld [vmem:[#allocation5 + $0x360] sm:$0xff]
    %v195 = vld [vmem:[#allocation5 + $0x368] sm:$0xf]
    %v196 = vld [vmem:[#allocation5 + $0x36c] sm:$0xff]
    %v197 = vld [vmem:[#allocation5 + $0x374] sm:$0xf]
    %v198 = vld [vmem:[#allocation5 + $0x378] sm:$0xff]
    %v199 = vld [vmem:[#allocation5 + $0x380] sm:$0xf]
    %v200 = vld [vmem:[#allocation5 + $0x384] sm:$0xff]
    %v201 = vld [vmem:[#allocation5 + $0x38c] sm:$0xf]
    %v202 = vld [vmem:[#allocation5 + $0x390] sm:$0xff]
    %v203 = vld [vmem:[#allocation5 + $0x398] sm:$0xf]
    %v204 = vld [vmem:[#allocation5 + $0x39c] sm:$0xff]
    %v205 = vld [vmem:[#allocation5 + $0x3a4] sm:$0xf]
    %v206 = vld [vmem:[#allocation5 + $0x3a8] sm:$0xff]
    %v207 = vld [vmem:[#allocation5 + $0x3b0] sm:$0xf]
    %v208 = vld [vmem:[#allocation5 + $0x3b4] sm:$0xff]
    %v209 = vld [vmem:[#allocation5 + $0x3bc] sm:$0xf]
    %v210 = vld [vmem:[#allocation5 + $0x3c0] sm:$0xff]
    %v211 = vld [vmem:[#allocation5 + $0x3c8] sm:$0xf]
    %v212 = vld [vmem:[#allocation5 + $0x3cc] sm:$0xff]
    %v213 = vld [vmem:[#allocation5 + $0x3d4] sm:$0xf]
    %v214 = vld [vmem:[#allocation5 + $0x3d8] sm:$0xff]
    %v215 = vld [vmem:[#allocation5 + $0x3e0] sm:$0xf]
    %v216 = vld [vmem:[#allocation5 + $0x3e4] sm:$0xff]
    %v217 = vld [vmem:[#allocation5 + $0x3ec] sm:$0xf]
    %v218 = vld [vmem:[#allocation5 + $0x3f0] sm:$0xff]
    %v219 = vld [vmem:[#allocation5 + $0x3f8] sm:$0xf]
    %v220 = vld [vmem:[#allocation5 + $0x3fc] sm:$0xff]
    %v221 = vld [vmem:[#allocation5 + $0x404] sm:$0xf]
    %v222 = vld [vmem:[#allocation5 + $0x408] sm:$0xff]
    %v223 = vld [vmem:[#allocation5 + $0x410] sm:$0xf]
    %v224 = vld [vmem:[#allocation5 + $0x414] sm:$0xff]
    %v225 = vld [vmem:[#allocation5 + $0x41c] sm:$0xf]
    %v226 = vld [vmem:[#allocation5 + $0x420] sm:$0xff]
    %v227 = vld [vmem:[#allocation5 + $0x428] sm:$0xf]
    %v228 = vld [vmem:[#allocation5 + $0x42c] sm:$0xff]
    %v229 = vld [vmem:[#allocation5 + $0x434] sm:$0xf]
    %v230 = vld [vmem:[#allocation5 + $0x438] sm:$0xff]
    %v231 = vld [vmem:[#allocation5 + $0x440] sm:$0xf]
    %v232 = vld [vmem:[#allocation5 + $0x444] sm:$0xff]
    %v233 = vld [vmem:[#allocation5 + $0x44c] sm:$0xf]
    %v234 = vld [vmem:[#allocation5 + $0x450] sm:$0xff]
    %v235 = vld [vmem:[#allocation5 + $0x458] sm:$0xf]
    %v236 = vld [vmem:[#allocation5 + $0x45c] sm:$0xff]
    %v237 = vld [vmem:[#allocation5 + $0x464] sm:$0xf]
    %v238 = vld [vmem:[#allocation5 + $0x468] sm:$0xff]
    %v239 = vld [vmem:[#allocation5 + $0x470] sm:$0xf]
    %v240 = vld [vmem:[#allocation5 + $0x474] sm:$0xff]
    %v241 = vld [vmem:[#allocation5 + $0x47c] sm:$0xf]
    %v248 = vunpack.c.l.b16 %v44
    %v249 = vunpack.c.h.b16 %v44
    %v250 = vunpack.c.l.b16 %v45
    %v251 = vunpack.c.h.b16 %v45
    %v252 = vunpack.c.l.b16 %v46
    %v253 = vunpack.c.h.b16 %v46
    %v254 = vunpack.c.l.b16 %v47
    %v255 = vunpack.c.h.b16 %v47
    %v256 = vunpack.c.l.b16 %v48
    %v257 = vunpack.c.h.b16 %v48
    %v258 = vunpack.c.l.b16 %v49
    %v259 = vunpack.c.h.b16 %v49
    %v260 = vpack.c.b16 %v254, %v248
    %v261 = vpack.c.b16 %v255, %v249
    %v262 = vpack.c.b16 %v256, %v250
    %v263 = vpack.c.b16 %v257, %v251
    %v264 = vpack.c.b16 %v258, %v252
    %v265 = vpack.c.b16 %v259, %v253
    %v464 = vunpack.c.l.b16 %v50
    %v465 = vunpack.c.h.b16 %v50
    %v466 = vunpack.c.l.b16 %v51
    %v467 = vunpack.c.l.b16 %v52
    %v468 = vunpack.c.h.b16 %v52
    %v469 = vunpack.c.l.b16 %v53
    %v470 = vunpack.c.l.b16 %v54
    %v471 = vunpack.c.h.b16 %v54
    %v472 = vunpack.c.l.b16 %v55
    %v473 = vunpack.c.l.b16 %v56
    %v474 = vunpack.c.h.b16 %v56
    %v475 = vunpack.c.l.b16 %v57
    %v476 = vunpack.c.l.b16 %v58
    %v477 = vunpack.c.h.b16 %v58
    %v478 = vunpack.c.l.b16 %v59
    %v479 = vunpack.c.l.b16 %v60
    %v480 = vunpack.c.h.b16 %v60
    %v481 = vunpack.c.l.b16 %v61
    %v482 = vunpack.c.l.b16 %v62
    %v483 = vunpack.c.h.b16 %v62
    %v484 = vunpack.c.l.b16 %v63
    %v485 = vunpack.c.l.b16 %v64
    %v486 = vunpack.c.h.b16 %v64
    %v487 = vunpack.c.l.b16 %v65
    %v488 = vunpack.c.l.b16 %v66
    %v489 = vunpack.c.h.b16 %v66
    %v490 = vunpack.c.l.b16 %v67
    %v491 = vunpack.c.l.b16 %v68
    %v492 = vunpack.c.h.b16 %v68
    %v493 = vunpack.c.l.b16 %v69
    %v494 = vunpack.c.l.b16 %v70
    %v495 = vunpack.c.h.b16 %v70
    %v496 = vunpack.c.l.b16 %v71
    %v497 = vunpack.c.l.b16 %v72
    %v498 = vunpack.c.h.b16 %v72
    %v499 = vunpack.c.l.b16 %v73
    %v500 = vunpack.c.l.b16 %v74
    %v501 = vunpack.c.h.b16 %v74
    %v502 = vunpack.c.l.b16 %v75
    %v503 = vunpack.c.l.b16 %v76
    %v504 = vunpack.c.h.b16 %v76
    %v505 = vunpack.c.l.b16 %v77
    %v506 = vunpack.c.l.b16 %v78
    %v507 = vunpack.c.h.b16 %v78
    %v508 = vunpack.c.l.b16 %v79
    %v509 = vunpack.c.l.b16 %v80
    %v510 = vunpack.c.h.b16 %v80
    %v511 = vunpack.c.l.b16 %v81
    %v512 = vunpack.c.l.b16 %v82
    %v513 = vunpack.c.h.b16 %v82
    %v514 = vunpack.c.l.b16 %v83
    %v515 = vunpack.c.l.b16 %v84
    %v516 = vunpack.c.h.b16 %v84
    %v517 = vunpack.c.l.b16 %v85
    %v518 = vunpack.c.l.b16 %v86
    %v519 = vunpack.c.h.b16 %v86
    %v520 = vunpack.c.l.b16 %v87
    %v521 = vunpack.c.l.b16 %v88
    %v522 = vunpack.c.h.b16 %v88
    %v523 = vunpack.c.l.b16 %v89
    %v524 = vunpack.c.l.b16 %v90
    %v525 = vunpack.c.h.b16 %v90
    %v526 = vunpack.c.l.b16 %v91
    %v527 = vunpack.c.l.b16 %v92
    %v528 = vunpack.c.h.b16 %v92
    %v529 = vunpack.c.l.b16 %v93
    %v530 = vunpack.c.l.b16 %v94
    %v531 = vunpack.c.h.b16 %v94
    %v532 = vunpack.c.l.b16 %v95
    %v533 = vunpack.c.l.b16 %v96
    %v534 = vunpack.c.h.b16 %v96
    %v535 = vunpack.c.l.b16 %v97
    %v536 = vunpack.c.l.b16 %v98
    %v537 = vunpack.c.h.b16 %v98
    %v538 = vunpack.c.l.b16 %v99
    %v539 = vunpack.c.l.b16 %v100
    %v540 = vunpack.c.h.b16 %v100
    %v541 = vunpack.c.l.b16 %v101
    %v542 = vunpack.c.l.b16 %v102
    %v543 = vunpack.c.h.b16 %v102
    %v544 = vunpack.c.l.b16 %v103
    %v545 = vunpack.c.l.b16 %v104
    %v546 = vunpack.c.h.b16 %v104
    %v547 = vunpack.c.l.b16 %v105
    %v548 = vunpack.c.l.b16 %v106
    %v549 = vunpack.c.h.b16 %v106
    %v550 = vunpack.c.l.b16 %v107
    %v551 = vunpack.c.l.b16 %v108
    %v552 = vunpack.c.h.b16 %v108
    %v553 = vunpack.c.l.b16 %v109
    %v554 = vunpack.c.l.b16 %v110
    %v555 = vunpack.c.h.b16 %v110
    %v556 = vunpack.c.l.b16 %v111
    %v557 = vunpack.c.l.b16 %v112
    %v558 = vunpack.c.h.b16 %v112
    %v559 = vunpack.c.l.b16 %v113
    %v560 = vunpack.c.l.b16 %v114
    %v561 = vunpack.c.h.b16 %v114
    %v562 = vunpack.c.l.b16 %v115
    %v563 = vunpack.c.l.b16 %v116
    %v564 = vunpack.c.h.b16 %v116
    %v565 = vunpack.c.l.b16 %v117
    %v566 = vunpack.c.l.b16 %v118
    %v567 = vunpack.c.h.b16 %v118
    %v568 = vunpack.c.l.b16 %v119
    %v569 = vunpack.c.l.b16 %v120
    %v570 = vunpack.c.h.b16 %v120
    %v571 = vunpack.c.l.b16 %v121
    %v572 = vunpack.c.l.b16 %v122
    %v573 = vunpack.c.h.b16 %v122
    %v574 = vunpack.c.l.b16 %v123
    %v575 = vunpack.c.l.b16 %v124
    %v576 = vunpack.c.h.b16 %v124
    %v577 = vunpack.c.l.b16 %v125
    %v578 = vunpack.c.l.b16 %v126
    %v579 = vunpack.c.h.b16 %v126
    %v580 = vunpack.c.l.b16 %v127
    %v581 = vunpack.c.l.b16 %v128
    %v582 = vunpack.c.h.b16 %v128
    %v583 = vunpack.c.l.b16 %v129
    %v584 = vunpack.c.l.b16 %v130
    %v585 = vunpack.c.h.b16 %v130
    %v586 = vunpack.c.l.b16 %v131
    %v587 = vunpack.c.l.b16 %v132
    %v588 = vunpack.c.h.b16 %v132
    %v589 = vunpack.c.l.b16 %v133
    %v590 = vunpack.c.l.b16 %v134
    %v591 = vunpack.c.h.b16 %v134
    %v592 = vunpack.c.l.b16 %v135
    %v593 = vunpack.c.l.b16 %v136
    %v594 = vunpack.c.h.b16 %v136
    %v595 = vunpack.c.l.b16 %v137
    %v596 = vunpack.c.l.b16 %v138
    %v597 = vunpack.c.h.b16 %v138
    %v598 = vunpack.c.l.b16 %v139
    %v599 = vunpack.c.l.b16 %v140
    %v600 = vunpack.c.h.b16 %v140
    %v601 = vunpack.c.l.b16 %v141
    %v602 = vunpack.c.l.b16 %v142
    %v603 = vunpack.c.h.b16 %v142
    %v604 = vunpack.c.l.b16 %v143
    %v605 = vunpack.c.l.b16 %v144
    %v606 = vunpack.c.h.b16 %v144
    %v607 = vunpack.c.l.b16 %v145
    %v608 = vunpack.c.l.b16 %v146
    %v609 = vunpack.c.h.b16 %v146
    %v610 = vunpack.c.l.b16 %v147
    %v611 = vunpack.c.l.b16 %v148
    %v612 = vunpack.c.h.b16 %v148
    %v613 = vunpack.c.l.b16 %v149
    %v614 = vunpack.c.l.b16 %v150
    %v615 = vunpack.c.h.b16 %v150
    %v616 = vunpack.c.l.b16 %v151
    %v617 = vunpack.c.l.b16 %v152
    %v618 = vunpack.c.h.b16 %v152
    %v619 = vunpack.c.l.b16 %v153
    %v620 = vunpack.c.l.b16 %v154
    %v621 = vunpack.c.h.b16 %v154
    %v622 = vunpack.c.l.b16 %v155
    %v623 = vunpack.c.l.b16 %v156
    %v624 = vunpack.c.h.b16 %v156
    %v625 = vunpack.c.l.b16 %v157
    %v626 = vunpack.c.l.b16 %v158
    %v627 = vunpack.c.h.b16 %v158
    %v628 = vunpack.c.l.b16 %v159
    %v629 = vunpack.c.l.b16 %v160
    %v630 = vunpack.c.h.b16 %v160
    %v631 = vunpack.c.l.b16 %v161
    %v632 = vunpack.c.l.b16 %v162
    %v633 = vunpack.c.h.b16 %v162
    %v634 = vunpack.c.l.b16 %v163
    %v635 = vunpack.c.l.b16 %v164
    %v636 = vunpack.c.h.b16 %v164
    %v637 = vunpack.c.l.b16 %v165
    %v638 = vunpack.c.l.b16 %v166
    %v639 = vunpack.c.h.b16 %v166
    %v640 = vunpack.c.l.b16 %v167
    %v641 = vunpack.c.l.b16 %v168
    %v642 = vunpack.c.h.b16 %v168
    %v643 = vunpack.c.l.b16 %v169
    %v644 = vunpack.c.l.b16 %v170
    %v645 = vunpack.c.h.b16 %v170
    %v646 = vunpack.c.l.b16 %v171
    %v647 = vunpack.c.l.b16 %v172
    %v648 = vunpack.c.h.b16 %v172
    %v649 = vunpack.c.l.b16 %v173
    %v650 = vunpack.c.l.b16 %v174
    %v651 = vunpack.c.h.b16 %v174
    %v652 = vunpack.c.l.b16 %v175
    %v653 = vunpack.c.l.b16 %v176
    %v654 = vunpack.c.h.b16 %v176
    %v655 = vunpack.c.l.b16 %v177
    %v656 = vunpack.c.l.b16 %v178
    %v657 = vunpack.c.h.b16 %v178
    %v658 = vunpack.c.l.b16 %v179
    %v659 = vunpack.c.l.b16 %v180
    %v660 = vunpack.c.h.b16 %v180
    %v661 = vunpack.c.l.b16 %v181
    %v662 = vunpack.c.l.b16 %v182
    %v663 = vunpack.c.h.b16 %v182
    %v664 = vunpack.c.l.b16 %v183
    %v665 = vunpack.c.l.b16 %v184
    %v666 = vunpack.c.h.b16 %v184
    %v667 = vunpack.c.l.b16 %v185
    %v668 = vunpack.c.l.b16 %v186
    %v669 = vunpack.c.h.b16 %v186
    %v670 = vunpack.c.l.b16 %v187
    %v671 = vunpack.c.l.b16 %v188
    %v672 = vunpack.c.h.b16 %v188
    %v673 = vunpack.c.l.b16 %v189
    %v674 = vunpack.c.l.b16 %v190
    %v675 = vunpack.c.h.b16 %v190
    %v676 = vunpack.c.l.b16 %v191
    %v677 = vunpack.c.l.b16 %v192
    %v678 = vunpack.c.h.b16 %v192
    %v679 = vunpack.c.l.b16 %v193
    %v680 = vunpack.c.l.b16 %v194
    %v681 = vunpack.c.h.b16 %v194
    %v682 = vunpack.c.l.b16 %v195
    %v683 = vunpack.c.l.b16 %v196
    %v684 = vunpack.c.h.b16 %v196
    %v685 = vunpack.c.l.b16 %v197
    %v686 = vunpack.c.l.b16 %v198
    %v687 = vunpack.c.h.b16 %v198
    %v688 = vunpack.c.l.b16 %v199
    %v689 = vunpack.c.l.b16 %v200
    %v690 = vunpack.c.h.b16 %v200
    %v691 = vunpack.c.l.b16 %v201
    %v692 = vunpack.c.l.b16 %v202
    %v693 = vunpack.c.h.b16 %v202
    %v694 = vunpack.c.l.b16 %v203
    %v695 = vunpack.c.l.b16 %v204
    %v696 = vunpack.c.h.b16 %v204
    %v697 = vunpack.c.l.b16 %v205
    %v698 = vunpack.c.l.b16 %v206
    %v699 = vunpack.c.h.b16 %v206
    %v700 = vunpack.c.l.b16 %v207
    %v701 = vunpack.c.l.b16 %v208
    %v702 = vunpack.c.h.b16 %v208
    %v703 = vunpack.c.l.b16 %v209
    %v704 = vunpack.c.l.b16 %v210
    %v705 = vunpack.c.h.b16 %v210
    %v706 = vunpack.c.l.b16 %v211
    %v707 = vunpack.c.l.b16 %v212
    %v708 = vunpack.c.h.b16 %v212
    %v709 = vunpack.c.l.b16 %v213
    %v710 = vunpack.c.l.b16 %v214
    %v711 = vunpack.c.h.b16 %v214
    %v712 = vunpack.c.l.b16 %v215
    %v713 = vunpack.c.l.b16 %v216
    %v714 = vunpack.c.h.b16 %v216
    %v715 = vunpack.c.l.b16 %v217
    %v716 = vunpack.c.l.b16 %v218
    %v717 = vunpack.c.h.b16 %v218
    %v718 = vunpack.c.l.b16 %v219
    %v719 = vunpack.c.l.b16 %v220
    %v720 = vunpack.c.h.b16 %v220
    %v721 = vunpack.c.l.b16 %v221
    %v722 = vunpack.c.l.b16 %v222
    %v723 = vunpack.c.h.b16 %v222
    %v724 = vunpack.c.l.b16 %v223
    %v725 = vunpack.c.l.b16 %v224
    %v726 = vunpack.c.h.b16 %v224
    %v727 = vunpack.c.l.b16 %v225
    %v728 = vunpack.c.l.b16 %v226
    %v729 = vunpack.c.h.b16 %v226
    %v730 = vunpack.c.l.b16 %v227
    %v731 = vunpack.c.l.b16 %v228
    %v732 = vunpack.c.h.b16 %v228
    %v733 = vunpack.c.l.b16 %v229
    %v734 = vunpack.c.l.b16 %v230
    %v735 = vunpack.c.h.b16 %v230
    %v736 = vunpack.c.l.b16 %v231
    %v737 = vunpack.c.l.b16 %v232
    %v738 = vunpack.c.h.b16 %v232
    %v739 = vunpack.c.l.b16 %v233
    %v740 = vunpack.c.l.b16 %v234
    %v741 = vunpack.c.h.b16 %v234
    %v742 = vunpack.c.l.b16 %v235
    %v743 = vunpack.c.l.b16 %v236
    %v744 = vunpack.c.h.b16 %v236
    %v745 = vunpack.c.l.b16 %v237
    %v746 = vunpack.c.l.b16 %v238
    %v747 = vunpack.c.h.b16 %v238
    %v748 = vunpack.c.l.b16 %v239
    %v749 = vunpack.c.l.b16 %v240
    %v750 = vunpack.c.h.b16 %v240
    %v751 = vunpack.c.l.b16 %v241
    %v752 = vpack.c.b16 %v467, %v464
    %v753 = vpack.c.b16 %v468, %v465
    %v754 = vpack.c.b16 %v469, %v466
    %v755 = vpack.c.b16 %v473, %v470
    %v756 = vpack.c.b16 %v474, %v471
    %v757 = vpack.c.b16 %v475, %v472
    %v758 = vpack.c.b16 %v479, %v476
    %v759 = vpack.c.b16 %v480, %v477
    %v760 = vpack.c.b16 %v481, %v478
    %v761 = vpack.c.b16 %v485, %v482
    %v762 = vpack.c.b16 %v486, %v483
    %v763 = vpack.c.b16 %v487, %v484
    %v764 = vpack.c.b16 %v491, %v488
    %v765 = vpack.c.b16 %v492, %v489
    %v766 = vpack.c.b16 %v493, %v490
    %v767 = vpack.c.b16 %v497, %v494
    %v768 = vpack.c.b16 %v498, %v495
    %v769 = vpack.c.b16 %v499, %v496
    %v770 = vpack.c.b16 %v503, %v500
    %v771 = vpack.c.b16 %v504, %v501
    %v772 = vpack.c.b16 %v505, %v502
    %v773 = vpack.c.b16 %v509, %v506
    %v774 = vpack.c.b16 %v510, %v507
    %v775 = vpack.c.b16 %v511, %v508
    %v776 = vpack.c.b16 %v515, %v512
    %v777 = vpack.c.b16 %v516, %v513
    %v778 = vpack.c.b16 %v517, %v514
    %v779 = vpack.c.b16 %v521, %v518
    %v780 = vpack.c.b16 %v522, %v519
    %v781 = vpack.c.b16 %v523, %v520
    %v782 = vpack.c.b16 %v527, %v524
    %v783 = vpack.c.b16 %v528, %v525
    %v784 = vpack.c.b16 %v529, %v526
    %v785 = vpack.c.b16 %v533, %v530
    %v786 = vpack.c.b16 %v534, %v531
    %v787 = vpack.c.b16 %v535, %v532
    %v788 = vpack.c.b16 %v539, %v536
    %v789 = vpack.c.b16 %v540, %v537
    %v790 = vpack.c.b16 %v541, %v538
    %v791 = vpack.c.b16 %v545, %v542
    %v792 = vpack.c.b16 %v546, %v543
    %v793 = vpack.c.b16 %v547, %v544
    %v794 = vpack.c.b16 %v551, %v548
    %v795 = vpack.c.b16 %v552, %v549
    %v796 = vpack.c.b16 %v553, %v550
    %v797 = vpack.c.b16 %v557, %v554
    %v798 = vpack.c.b16 %v558, %v555
    %v799 = vpack.c.b16 %v559, %v556
    %v800 = vpack.c.b16 %v563, %v560
    %v801 = vpack.c.b16 %v564, %v561
    %v802 = vpack.c.b16 %v565, %v562
    %v803 = vpack.c.b16 %v569, %v566
    %v804 = vpack.c.b16 %v570, %v567
    %v805 = vpack.c.b16 %v571, %v568
    %v806 = vpack.c.b16 %v575, %v572
    %v807 = vpack.c.b16 %v576, %v573
    %v808 = vpack.c.b16 %v577, %v574
    %v809 = vpack.c.b16 %v581, %v578
    %v810 = vpack.c.b16 %v582, %v579
    %v811 = vpack.c.b16 %v583, %v580
    %v812 = vpack.c.b16 %v587, %v584
    %v813 = vpack.c.b16 %v588, %v585
    %v814 = vpack.c.b16 %v589, %v586
    %v815 = vpack.c.b16 %v593, %v590
    %v816 = vpack.c.b16 %v594, %v591
    %v817 = vpack.c.b16 %v595, %v592
    %v818 = vpack.c.b16 %v599, %v596
    %v819 = vpack.c.b16 %v600, %v597
    %v820 = vpack.c.b16 %v601, %v598
    %v821 = vpack.c.b16 %v605, %v602
    %v822 = vpack.c.b16 %v606, %v603
    %v823 = vpack.c.b16 %v607, %v604
    %v824 = vpack.c.b16 %v611, %v608
    %v825 = vpack.c.b16 %v612, %v609
    %v826 = vpack.c.b16 %v613, %v610
    %v827 = vpack.c.b16 %v617, %v614
    %v828 = vpack.c.b16 %v618, %v615
    %v829 = vpack.c.b16 %v619, %v616
    %v830 = vpack.c.b16 %v623, %v620
    %v831 = vpack.c.b16 %v624, %v621
    %v832 = vpack.c.b16 %v625, %v622
    %v833 = vpack.c.b16 %v629, %v626
    %v834 = vpack.c.b16 %v630, %v627
    %v835 = vpack.c.b16 %v631, %v628
    %v836 = vpack.c.b16 %v635, %v632
    %v837 = vpack.c.b16 %v636, %v633
    %v838 = vpack.c.b16 %v637, %v634
    %v839 = vpack.c.b16 %v641, %v638
    %v840 = vpack.c.b16 %v642, %v639
    %v841 = vpack.c.b16 %v643, %v640
    %v842 = vpack.c.b16 %v647, %v644
    %v843 = vpack.c.b16 %v648, %v645
    %v844 = vpack.c.b16 %v649, %v646
    %v845 = vpack.c.b16 %v653, %v650
    %v846 = vpack.c.b16 %v654, %v651
    %v847 = vpack.c.b16 %v655, %v652
    %v848 = vpack.c.b16 %v659, %v656
    %v849 = vpack.c.b16 %v660, %v657
    %v850 = vpack.c.b16 %v661, %v658
    %v851 = vpack.c.b16 %v665, %v662
    %v852 = vpack.c.b16 %v666, %v663
    %v853 = vpack.c.b16 %v667, %v664
    %v854 = vpack.c.b16 %v671, %v668
    %v855 = vpack.c.b16 %v672, %v669
    %v856 = vpack.c.b16 %v673, %v670
    %v857 = vpack.c.b16 %v677, %v674
    %v858 = vpack.c.b16 %v678, %v675
    %v859 = vpack.c.b16 %v679, %v676
    %v860 = vpack.c.b16 %v683, %v680
    %v861 = vpack.c.b16 %v684, %v681
    %v862 = vpack.c.b16 %v685, %v682
    %v863 = vpack.c.b16 %v689, %v686
    %v864 = vpack.c.b16 %v690, %v687
    %v865 = vpack.c.b16 %v691, %v688
    %v866 = vpack.c.b16 %v695, %v692
    %v867 = vpack.c.b16 %v696, %v693
    %v868 = vpack.c.b16 %v697, %v694
    %v869 = vpack.c.b16 %v701, %v698
    %v870 = vpack.c.b16 %v702, %v699
    %v871 = vpack.c.b16 %v703, %v700
    %v872 = vpack.c.b16 %v707, %v704
    %v873 = vpack.c.b16 %v708, %v705
    %v874 = vpack.c.b16 %v709, %v706
    %v875 = vpack.c.b16 %v713, %v710
    %v876 = vpack.c.b16 %v714, %v711
    %v877 = vpack.c.b16 %v715, %v712
    %v878 = vpack.c.b16 %v719, %v716
    %v879 = vpack.c.b16 %v720, %v717
    %v880 = vpack.c.b16 %v721, %v718
    %v881 = vpack.c.b16 %v725, %v722
    %v882 = vpack.c.b16 %v726, %v723
    %v883 = vpack.c.b16 %v727, %v724
    %v884 = vpack.c.b16 %v731, %v728
    %v885 = vpack.c.b16 %v732, %v729
    %v886 = vpack.c.b16 %v733, %v730
    %v887 = vpack.c.b16 %v737, %v734
    %v888 = vpack.c.b16 %v738, %v735
    %v889 = vpack.c.b16 %v739, %v736
    %v890 = vpack.c.b16 %v743, %v740
    %v891 = vpack.c.b16 %v744, %v741
    %v892 = vpack.c.b16 %v745, %v742
    %v893 = vpack.c.b16 %v749, %v746
    %v894 = vpack.c.b16 %v750, %v747
    %v895 = vpack.c.b16 %v751, %v748
    %1040 = vmatprep.subr.bf16.mxu0 %v774
    %1041 = vmatpush1.bf16.msra.mxu0 %v773
    %1042 = vmatprep.subr.bf16.mxu0 %v771
    %1043 = vmatpush1.bf16.msra.mxu0 %v770
    %1044 = vmatprep.subr.bf16.mxu0 %v768
    %1045 = vmatpush1.bf16.msra.mxu0 %v767
    %1046 = vmatprep.subr.bf16.mxu0 %v765
    %1047 = vmatpush1.bf16.msra.mxu0 %v764
    %1048 = vmatprep.subr.bf16.mxu0 %v762
    %1049 = vmatpush1.bf16.msra.mxu0 %v761
    %1050 = vmatprep.subr.bf16.mxu0 %v759
    %1051 = vmatpush1.bf16.msra.mxu0 %v758
    %1052 = vmatprep.subr.bf16.mxu0 %v756
    %1053 = vmatpush1.bf16.msra.mxu0 %v755
    %1054 = vmatprep.subr.bf16.mxu0 %v753
    %1055 = vmatpush1.bf16.msra.mxu0 %v752
    %1056 = vmatprep.subr.bf16.mxu0 %v798
    %1057 = vmatpush2.bf16.msra.mxu0 %v797
    %1058 = vmatprep.subr.bf16.mxu0 %v795
    %1059 = vmatpush2.bf16.msra.mxu0 %v794
    %1060 = vmatprep.subr.bf16.mxu0 %v792
    %1061 = vmatpush2.bf16.msra.mxu0 %v791
    %1062 = vmatprep.subr.bf16.mxu0 %v789
    %1063 = vmatpush2.bf16.msra.mxu0 %v788
    %1064 = vmatprep.subr.bf16.mxu0 %v786
    %1065 = vmatpush2.bf16.msra.mxu0 %v785
    %1066 = vmatprep.subr.bf16.mxu0 %v783
    %1067 = vmatpush2.bf16.msra.mxu0 %v782
    %1068 = vmatprep.subr.bf16.mxu0 %v780
    %1069 = vmatpush2.bf16.msra.mxu0 %v779
    %1070 = vmatprep.subr.bf16.mxu0 %v777
    %1071 = vmatpush2.bf16.msra.mxu0 %v776
    %1072 = vmatprep.mubr.bf16.mxu0 %v261
    %1073 = vmatmul.mubr.bf16.gmra.mxu0 %v260
    %v1074 = vpop.f32.mrf.mxu0
    %v1075 = vadd.f32 0.0, %v1074
    %v1076 = vpop.f32.mrf.mxu0
    %v1077 = vadd.f32 0.0, %v1076
    %v1078 = vpop.f32.mrf.mxu0
    %v1079 = vadd.f32 0.0, %v1078
    %v1080 = vpop.f32.mrf.mxu0
    %v1081 = vadd.f32 0.0, %v1080
    %1082 = vdwg.mxu0
    %1083 = vmatprep.subr.bf16.mxu0 %v822
    %1084 = vmatpush1.bf16.msra.mxu0 %v821
    %1085 = vmatprep.subr.bf16.mxu0 %v819
    %1086 = vmatpush1.bf16.msra.mxu0 %v818
    %1087 = vmatprep.subr.bf16.mxu0 %v816
    %1088 = vmatpush1.bf16.msra.mxu0 %v815
    %1089 = vmatprep.subr.bf16.mxu0 %v813
    %1090 = vmatpush1.bf16.msra.mxu0 %v812
    %1091 = vmatprep.subr.bf16.mxu0 %v810
    %1092 = vmatpush1.bf16.msra.mxu0 %v809
    %1093 = vmatprep.subr.bf16.mxu0 %v807
    %1094 = vmatpush1.bf16.msra.mxu0 %v806
    %1095 = vmatprep.subr.bf16.mxu0 %v804
    %1096 = vmatpush1.bf16.msra.mxu0 %v803
    %1097 = vmatprep.subr.bf16.mxu0 %v801
    %1098 = vmatpush1.bf16.msra.mxu0 %v800
    %1099 = vmatprep.subr.bf16.mxu0 %v846
    %1100 = vmatpush2.bf16.msra.mxu0 %v845
    %1101 = vmatprep.subr.bf16.mxu0 %v843
    %1102 = vmatpush2.bf16.msra.mxu0 %v842
    %1103 = vmatprep.subr.bf16.mxu0 %v840
    %1104 = vmatpush2.bf16.msra.mxu0 %v839
    %1105 = vmatprep.subr.bf16.mxu0 %v837
    %1106 = vmatpush2.bf16.msra.mxu0 %v836
    %1107 = vmatprep.subr.bf16.mxu0 %v834
    %1108 = vmatpush2.bf16.msra.mxu0 %v833
    %1109 = vmatprep.subr.bf16.mxu0 %v831
    %1110 = vmatpush2.bf16.msra.mxu0 %v830
    %1111 = vmatprep.subr.bf16.mxu0 %v828
    %1112 = vmatpush2.bf16.msra.mxu0 %v827
    %1113 = vmatprep.subr.bf16.mxu0 %v825
    %1114 = vmatpush2.bf16.msra.mxu0 %v824
    %1115 = vmatprep.mubr.bf16.mxu0 %v263
    %1116 = vmatmul.mubr.bf16.gmra.mxu0 %v262
    %v1117 = vpop.f32.mrf.mxu0
    %v1118 = vadd.f32 %v1075, %v1117
    %v1119 = vpop.f32.mrf.mxu0
    %v1120 = vadd.f32 %v1077, %v1119
    %v1121 = vpop.f32.mrf.mxu0
    %v1122 = vadd.f32 %v1079, %v1121
    %v1123 = vpop.f32.mrf.mxu0
    %v1124 = vadd.f32 %v1081, %v1123
    %1125 = vdwg.mxu0
    %1126 = vmatprep.subr.bf16.mxu0 %v870
    %1127 = vmatpush1.bf16.msra.mxu0 %v869
    %1128 = vmatprep.subr.bf16.mxu0 %v867
    %1129 = vmatpush1.bf16.msra.mxu0 %v866
    %1130 = vmatprep.subr.bf16.mxu0 %v864
    %1131 = vmatpush1.bf16.msra.mxu0 %v863
    %1132 = vmatprep.subr.bf16.mxu0 %v861
    %1133 = vmatpush1.bf16.msra.mxu0 %v860
    %1134 = vmatprep.subr.bf16.mxu0 %v858
    %1135 = vmatpush1.bf16.msra.mxu0 %v857
    %1136 = vmatprep.subr.bf16.mxu0 %v855
    %1137 = vmatpush1.bf16.msra.mxu0 %v854
    %1138 = vmatprep.subr.bf16.mxu0 %v852
    %1139 = vmatpush1.bf16.msra.mxu0 %v851
    %1140 = vmatprep.subr.bf16.mxu0 %v849
    %1141 = vmatpush1.bf16.msra.mxu0 %v848
    %1142 = vmatprep.subr.bf16.mxu0 %v894
    %1143 = vmatpush2.bf16.msra.mxu0 %v893
    %1144 = vmatprep.subr.bf16.mxu0 %v891
    %1145 = vmatpush2.bf16.msra.mxu0 %v890
    %1146 = vmatprep.subr.bf16.mxu0 %v888
    %1147 = vmatpush2.bf16.msra.mxu0 %v887
    %1148 = vmatprep.subr.bf16.mxu0 %v885
    %1149 = vmatpush2.bf16.msra.mxu0 %v884
    %1150 = vmatprep.subr.bf16.mxu0 %v882
    %1151 = vmatpush2.bf16.msra.mxu0 %v881
    %1152 = vmatprep.subr.bf16.mxu0 %v879
    %1153 = vmatpush2.bf16.msra.mxu0 %v878
    %1154 = vmatprep.subr.bf16.mxu0 %v876
    %1155 = vmatpush2.bf16.msra.mxu0 %v875
    %1156 = vmatprep.subr.bf16.mxu0 %v873
    %1157 = vmatpush2.bf16.msra.mxu0 %v872
    %1158 = vmatprep.mubr.bf16.mxu0 %v265
    %1159 = vmatmul.mubr.bf16.gmra.mxu0 %v264
    %v1160 = vpop.f32.mrf.mxu0
    %v1161 = vadd.f32 %v1118, %v1160
    %v1162 = vpop.f32.mrf.mxu0
    %v1163 = vadd.f32 %v1120, %v1162
    %v1164 = vpop.f32.mrf.mxu0
    %v1165 = vadd.f32 %v1122, %v1164
    %v1166 = vpop.f32.mrf.mxu0
    %v1167 = vadd.f32 %v1124, %v1166
    %1168 = vdwg.mxu0
    %1169 = vmatprep.subr.bf16.mxu0 0
    %1170 = vmatpush1.bf16.msra.mxu0 %v775
    %1171 = vmatprep.subr.bf16.mxu0 0
    %1172 = vmatpush1.bf16.msra.mxu0 %v772
    %1173 = vmatprep.subr.bf16.mxu0 0
    %1174 = vmatpush1.bf16.msra.mxu0 %v769
    %1175 = vmatprep.subr.bf16.mxu0 0
    %1176 = vmatpush1.bf16.msra.mxu0 %v766
    %1177 = vmatprep.subr.bf16.mxu0 0
    %1178 = vmatpush1.bf16.msra.mxu0 %v763
    %1179 = vmatprep.subr.bf16.mxu0 0
    %1180 = vmatpush1.bf16.msra.mxu0 %v760
    %1181 = vmatprep.subr.bf16.mxu0 0
    %1182 = vmatpush1.bf16.msra.mxu0 %v757
    %1183 = vmatprep.subr.bf16.mxu0 0
    %1184 = vmatpush1.bf16.msra.mxu0 %v754
    %1185 = vmatprep.subr.bf16.mxu0 0
    %1186 = vmatpush2.bf16.msra.mxu0 %v799
    %1187 = vmatprep.subr.bf16.mxu0 0
    %1188 = vmatpush2.bf16.msra.mxu0 %v796
    %1189 = vmatprep.subr.bf16.mxu0 0
    %1190 = vmatpush2.bf16.msra.mxu0 %v793
    %1191 = vmatprep.subr.bf16.mxu0 0
    %1192 = vmatpush2.bf16.msra.mxu0 %v790
    %1193 = vmatprep.subr.bf16.mxu0 0
    %1194 = vmatpush2.bf16.msra.mxu0 %v787
    %1195 = vmatprep.subr.bf16.mxu0 0
    %1196 = vmatpush2.bf16.msra.mxu0 %v784
    %1197 = vmatprep.subr.bf16.mxu0 0
    %1198 = vmatpush2.bf16.msra.mxu0 %v781
    %1199 = vmatprep.subr.bf16.mxu0 0
    %1200 = vmatpush2.bf16.msra.mxu0 %v778
    %1201 = vmatprep.mubr.bf16.mxu0 %v261
    %1202 = vmatmul.mubr.bf16.gmra.mxu0 %v260
    %v1203 = vpop.f32.mrf.mxu0
    %v1204 = vadd.f32 0.0, %v1203
    %v1205 = vpop.f32.mrf.mxu0
    %v1206 = vpop.f32.mrf.mxu0
    %v1207 = vadd.f32 0.0, %v1206
    %v1208 = vpop.f32.mrf.mxu0
    %1209 = vdwg.mxu0
    %1210 = vmatprep.subr.bf16.mxu0 0
    %1211 = vmatpush1.bf16.msra.mxu0 %v823
    %1212 = vmatprep.subr.bf16.mxu0 0
    %1213 = vmatpush1.bf16.msra.mxu0 %v820
    %1214 = vmatprep.subr.bf16.mxu0 0
    %1215 = vmatpush1.bf16.msra.mxu0 %v817
    %1216 = vmatprep.subr.bf16.mxu0 0
    %1217 = vmatpush1.bf16.msra.mxu0 %v814
    %1218 = vmatprep.subr.bf16.mxu0 0
    %1219 = vmatpush1.bf16.msra.mxu0 %v811
    %1220 = vmatprep.subr.bf16.mxu0 0
    %1221 = vmatpush1.bf16.msra.mxu0 %v808
    %1222 = vmatprep.subr.bf16.mxu0 0
    %1223 = vmatpush1.bf16.msra.mxu0 %v805
    %1224 = vmatprep.subr.bf16.mxu0 0
    %1225 = vmatpush1.bf16.msra.mxu0 %v802
    %1226 = vmatprep.subr.bf16.mxu0 0
    %1227 = vmatpush2.bf16.msra.mxu0 %v847
    %1228 = vmatprep.subr.bf16.mxu0 0
    %1229 = vmatpush2.bf16.msra.mxu0 %v844
    %1230 = vmatprep.subr.bf16.mxu0 0
    %1231 = vmatpush2.bf16.msra.mxu0 %v841
    %1232 = vmatprep.subr.bf16.mxu0 0
    %1233 = vmatpush2.bf16.msra.mxu0 %v838
    %1234 = vmatprep.subr.bf16.mxu0 0
    %1235 = vmatpush2.bf16.msra.mxu0 %v835
    %1236 = vmatprep.subr.bf16.mxu0 0
    %1237 = vmatpush2.bf16.msra.mxu0 %v832
    %1238 = vmatprep.subr.bf16.mxu0 0
    %1239 = vmatpush2.bf16.msra.mxu0 %v829
    %1240 = vmatprep.subr.bf16.mxu0 0
    %1241 = vmatpush2.bf16.msra.mxu0 %v826
    %1242 = vmatprep.mubr.bf16.mxu0 %v263
    %1243 = vmatmul.mubr.bf16.gmra.mxu0 %v262
    %v1244 = vpop.f32.mrf.mxu0
    %v1245 = vadd.f32 %v1204, %v1244
    %v1246 = vpop.f32.mrf.mxu0
    %v1247 = vpop.f32.mrf.mxu0
    %v1248 = vadd.f32 %v1207, %v1247
    %v1249 = vpop.f32.mrf.mxu0
    %1250 = vdwg.mxu0
    %1251 = vmatprep.subr.bf16.mxu0 0
    %1252 = vmatpush1.bf16.msra.mxu0 %v871
    %1253 = vmatprep.subr.bf16.mxu0 0
    %1254 = vmatpush1.bf16.msra.mxu0 %v868
    %1255 = vmatprep.subr.bf16.mxu0 0
    %1256 = vmatpush1.bf16.msra.mxu0 %v865
    %1257 = vmatprep.subr.bf16.mxu0 0
    %1258 = vmatpush1.bf16.msra.mxu0 %v862
    %1259 = vmatprep.subr.bf16.mxu0 0
    %1260 = vmatpush1.bf16.msra.mxu0 %v859
    %1261 = vmatprep.subr.bf16.mxu0 0
    %1262 = vmatpush1.bf16.msra.mxu0 %v856
    %1263 = vmatprep.subr.bf16.mxu0 0
    %1264 = vmatpush1.bf16.msra.mxu0 %v853
    %1265 = vmatprep.subr.bf16.mxu0 0
    %1266 = vmatpush1.bf16.msra.mxu0 %v850
    %1267 = vmatprep.subr.bf16.mxu0 0
    %1268 = vmatpush2.bf16.msra.mxu0 %v895
    %1269 = vmatprep.subr.bf16.mxu0 0
    %1270 = vmatpush2.bf16.msra.mxu0 %v892
    %1271 = vmatprep.subr.bf16.mxu0 0
    %1272 = vmatpush2.bf16.msra.mxu0 %v889
    %1273 = vmatprep.subr.bf16.mxu0 0
    %1274 = vmatpush2.bf16.msra.mxu0 %v886
    %1275 = vmatprep.subr.bf16.mxu0 0
    %1276 = vmatpush2.bf16.msra.mxu0 %v883
    %1277 = vmatprep.subr.bf16.mxu0 0
    %1278 = vmatpush2.bf16.msra.mxu0 %v880
    %1279 = vmatprep.subr.bf16.mxu0 0
    %1280 = vmatpush2.bf16.msra.mxu0 %v877
    %1281 = vmatprep.subr.bf16.mxu0 0
    %1282 = vmatpush2.bf16.msra.mxu0 %v874
    %1283 = vmatprep.mubr.bf16.mxu0 %v265
    %1284 = vmatmul.mubr.bf16.gmra.mxu0 %v264
    %v1285 = vpop.f32.mrf.mxu0
    %v1286 = vadd.f32 %v1245, %v1285
    %v1287 = vpop.f32.mrf.mxu0
    %v1288 = vpop.f32.mrf.mxu0
    %v1289 = vadd.f32 %v1248, %v1288
    %v1290 = vpop.f32.mrf.mxu0
    %1291 = vdwg.mxu0
    %v1292 = vlaneseq
    %v1293 = vshrl.u32 %v1292, 7
    %v1294 = vadd.s32 %v1293, 8
    %vm1295 = vcmp.lt.s32.totalorder %v1293, 0
    %v1296 = vsub.s32 0, %v1293
    %v1297 = vsel %vm1295, %v1296, %v1293
    %v1298 = vshrl.u32 %v1297, 3
    %v1299 = vand.u32 %v1297, 7
    %v1300 = vsub.s32 0, %v1299
    %v1301 = vsel %vm1295, %v1300, %v1299
    %vm1302 = vcmp.lt.s32.totalorder %v1294, 0
    %v1303 = vsub.s32 0, %v1294
    %v1304 = vsel %vm1302, %v1303, %v1294
    %v1305 = vshrl.u32 %v1304, 3
    %v1306 = vand.u32 %v1304, 7
    %v1307 = vsub.s32 0, %v1306
    %v1308 = vsel %vm1302, %v1307, %v1306
    %vm1309 = vcmp.ne.s32.totalorder %v1301, 0
    %vm1310 = vcmp.ne.s32.totalorder %v1308, 0
    %vm1311 = vcmp.lt.s32.totalorder %v1301, 0
    %vm1312 = vcmp.lt.s32.totalorder %v1308, 0
    %vm1313 = vmand %vm1311, %vm1309
    %vm1314 = vmand %vm1312, %vm1310
    %v1315 = vadd.s32 %v1301, 8
    %v1316 = vadd.s32 %v1308, 8
    %v1317 = vsel %vm1313, %v1315, %v1301
    %v1318 = vsel %vm1314, %v1316, %v1308
    %vm1319 = vcmp.eq.s32.totalorder %v1317, 0
    %vm1320 = vcmp.eq.s32.totalorder %v1318, 0
    %v1321 = vrot.slane %v1161, 7
    %v1322 = vrot.slane %v1165, 7
    %vm1323 = vcmp.lt.s32.totalorder %v1293, 1
    %v1324 = vsel %vm1323, %v1321, %v1322
    %v1325 = vsel %vm1323, %v1322, %v1321
    %v1326 = vsel %vm1319, 0.0, %v1325
    %v1327 = vsel %vm1320, 0.0, %v1324
    %vm1328 = vcmp.eq.s32.totalorder %v1317, 7
    %vm1329 = vcmp.eq.s32.totalorder %v1318, 7
    %v1330 = vrot.slane %v1286, 1
    %v1331 = vrot.slane %v1289, 1
    %vm1332 = vcmp.lt.s32.totalorder %v1293, 7
    %v1333 = vsel %vm1332, %v1330, %v1331
    %v1334 = vsel %vm1332, %v1331, %v1330
    %v1335 = vsel %vm1328, 0.0, %v1333
    %v1336 = vsel %vm1329, 0.0, %v1334
    %v1337 = vadd.f32 %v1326, %v1163
    %v1338 = vadd.f32 %v1327, %v1167
    %v1339 = vadd.f32 %v1337, %v1335
    %v1340 = vadd.f32 %v1338, %v1336
    %v1341 = vld [vmem:[%s2] sm:$0x1]
    %v1343 = vlaneseq
    %v1344 = vshrl.u32 %v1343, 7
    %v1345 = vsub.s32 0, %v1344
    %v1346 = vrot.slane %v1341, %v1345
    %v1348 = vadd.f32 %v1339, %v1346
    %v1349 = vadd.f32 %v1340, %v1346
    %v1350 = vmax.f32 %v1348, 0.0
    %v1351 = vmax.f32 %v1349, 0.0
    %v1352 = vrot.slane %v1350, 4
    %v1353 = vmax.f32 %v1350, %v1352
    %v1354 = vrot.slane %v1353, 2
    %v1355 = vmax.f32 %v1353, %v1354
    %v1356 = vrot.slane %v1355, 1
    %v1357 = vmax.f32 %v1355, %v1356
    %v1358 = vrot.slane %v1351, 4
    %v1359 = vmax.f32 %v1351, %v1358
    %v1360 = vrot.slane %v1359, 2
    %v1361 = vmax.f32 %v1359, %v1360
    %v1362 = vrot.slane %v1361, 1
    %v1363 = vmax.f32 %v1361, %v1362
    %vm1366 = vcmask 1041409
    %v1367 = vsel %vm1366, %v1363, %v1357
    %1369 = vst [vmem:[#allocation7] sm:$0x3] %v1367
    // Predicated region
    $region22: #{tpu_custom_call.1} parent=1 // pred_check
      _
    $region23: #{tpu_custom_call.1} parent=1 // pred_check_branch
      %1371 = sbr.rel (0) target = $region25
    $region24: #{tpu_custom_call.1} parent=1 // pred_region
      %s1373 = ssub.s32 32, 32
      %1374 = vsyncadd [#allocation4], %s1373
      %s1376 = sshll.u32 [#allocation7], 4
      %s1377 = int_to_ptr.vmem [resolvable:$true] %s1376
      %1379 = dma.vmem_to_hbm [thread:$0]  %s1377, 32, %s3, [#allocation4]
    $region25: #{tpu_custom_call.1} parent=1 // pred_fallthru
      _
    // Predicated region
    $region26: #{tpu_custom_call.1} parent=1 // pred_check
      _
    $region27: #{tpu_custom_call.1} parent=1 // pred_check_branch
      %1381 = sbr.rel (0) target = $region29
    $region28: #{tpu_custom_call.1} parent=1 // pred_region
      %1382 = dma.done [#allocation4], 32
    $region29: #{tpu_custom_call.1} parent=1 // pred_fallthru
      _
    %1383 = vsyncpa [#allocation3], 1
    %1384 = vsyncpa [#allocation6], 1
    %1385 = vsyncpa [#allocation4], 1

</llo_original>
